<compile_context>
chip_gen: v5e
topology: v5e:2x2
jax: 0.10.0
libtpu: 0.0.40
codegen_flags: <defaults>
</compile_context>

<pallas_src>
import itertools

import jax
import jax.numpy as jnp
from jax.experimental import pallas as pl
from jax.experimental.pallas import tpu as pltpu


def make_flen_kernel(M, F, D):
    """Build the FLEN kernel for a fixed number of field groups M, fields F, dim D."""

    def kernel(*refs):
        # refs layout: [x_0..x_{M-1}, extra, kmf, kfm, bias_fwbi,
        #               w1_0..w1_{M-1}, b1, wp_fwbi, wp_dnn, wp_extra, bp, out]
        x_refs = refs[0:M]                       # each (TB, F*D) f32
        extra_ref = refs[M]                      # (TB, dim2) f32
        kmf_ref = refs[M + 1]                    # (P,)  f32 in SMEM
        kfm_ref = refs[M + 2]                    # (M,)  f32 in SMEM
        bias_ref = refs[M + 3]                   # (1, D) f32   (bias_mf + bias_fm)
        w1_refs = refs[M + 4:2 * M + 4]          # each (F*D, H) bf16
        b1_ref = refs[2 * M + 4]                 # (1, H)
        wp_fwbi_ref = refs[2 * M + 5]            # (1, D)
        wp_dnn_ref = refs[2 * M + 6]             # (1, H)
        wp_extra_ref = refs[2 * M + 7]           # (1, dim2)
        bp_ref = refs[2 * M + 8]                 # (1, out_dim)
        out_ref = refs[2 * M + 9]                # (TB, out_dim)

        fvs = []
        h_fm = None
        dnn_acc = None
        for m in range(M):
            xm = x_refs[m][...]                              # (TB, F*D) f32

            # ---- per-group field statistics (VPU, f32) ----
            sl0 = xm[:, 0:D]
            fv_m = sl0
            ssq_m = sl0 * sl0
            for f in range(1, F):
                sl = xm[:, f * D:(f + 1) * D]
                fv_m = fv_m + sl
                ssq_m = ssq_m + sl * sl
            fvs.append(fv_m)

            # ---- FM module: within-group (square_of_sum - sum_of_square) ----
            term = (fv_m * fv_m - ssq_m) * kfm_ref[m]        # scalar from SMEM
            h_fm = term if h_fm is None else h_fm + term

            # ---- DNN tower partial matmul (MXU, bf16 in / f32 acc) ----
            partial = jnp.dot(xm.astype(jnp.bfloat16), w1_refs[m][...],
                              preferred_element_type=jnp.float32)
            dnn_acc = partial if dnn_acc is None else dnn_acc + partial

        # ---- MF module: pairwise cross-group interactions (VPU) ----
        h_mf = jnp.zeros_like(fvs[0])
        p = 0
        for i in range(M):
            for j in range(i + 1, M):
                h_mf = h_mf + (fvs[i] * fvs[j]) * kmf_ref[p]
                p += 1

        fwbi = h_mf + h_fm + bias_ref[...]                   # (TB, D)
        dnn = jnp.maximum(dnn_acc + b1_ref[...], 0.0)        # (TB, H) f32

        # ---- Projection (out_dim == 1): VPU multiply + XLU lane reduction ----
        out = (jnp.sum(fwbi * wp_fwbi_ref[...], axis=-1, keepdims=True)
               + jnp.sum(dnn * wp_dnn_ref[...], axis=-1, keepdims=True)
               + jnp.sum(extra_ref[...] * wp_extra_ref[...], axis=-1, keepdims=True)
               + bp_ref[...])                                # apply_final_act=False
        out_ref[...] = out.astype(out_ref.dtype)

    return kernel


def _round_up(x, m):
    return ((x + m - 1) // m) * m


def flen_forward(inputs_list, extra, params, *, block_batch=256):
    """Glue: reshape groups to lane-dense slabs, split weights, launch the kernel."""
    M = len(inputs_list)
    B, F, D = inputs_list[0].shape

    H = params["w1"].shape[1]
    dim2 = extra.shape[1]
    wp = params["wp"]                                        # (D + H + dim2, out_dim)
    out_dim = wp.shape[1]
    # TODO(synk): out_dim > 1 would need an MXU projection path; module default is [1].
    assert out_dim == 1, "VPU projection path assumes projection_hidden_units=[1]"

    wp_fwbi = wp[:D].T                                       # (1, D)
    wp_dnn = wp[D:D + H].T                                   # (1, H)
    wp_extra = wp[D + H:].T                                  # (1, dim2)
    bias_fwbi = params["bias_mf"] + params["bias_fm"]        # (1, D)
    w1 = params["w1"].astype(jnp.bfloat16)
    w1_chunks = [w1[m * F * D:(m + 1) * F * D] for m in range(M)]   # (F*D, H) each

    # Per-group slabs: free contiguous reshape, no extra HBM pass.
    xs = [t.reshape(B, F * D).astype(jnp.float32) for t in inputs_list]
    extra = extra.astype(jnp.float32)

    # Batch tiling: TB multiple of 8 (f32 sublane packing); pad batch to a
    # multiple of TB so every grid step sees a full block.
    TB = min(block_batch, _round_up(B, 8))
    Bp = _round_up(B, TB)
    if Bp != B:
        pad = ((0, Bp - B), (0, 0))
        xs = [jnp.pad(t, pad) for t in xs]
        extra = jnp.pad(extra, pad)

    def batch_spec(cols):
        return pl.BlockSpec((TB, cols), lambda i: (i, 0))

    def const_spec(shape):
        return pl.BlockSpec(shape, lambda i: (0, 0))         # VMEM-resident, DMA'd once

    smem = pl.BlockSpec(memory_space=pltpu.MemorySpace.SMEM)

    in_specs = ([batch_spec(F * D)] * M                      # x_m slabs (f32)
                + [batch_spec(dim2)]                         # extra
                + [smem, smem]                               # kernel_mf, kernel_fm
                + [const_spec((1, D))]                       # bias_mf + bias_fm
                + [const_spec((F * D, H))] * M               # W1 row chunks (bf16)
                + [const_spec((1, H)),                       # b1
                   const_spec((1, D)),                       # wp rows for fwbi
                   const_spec((1, H)),                       # wp rows for dnn
                   const_spec((1, dim2)),                    # wp rows for extra
                   const_spec((1, out_dim))])                # bp

    out = pl.pallas_call(
        make_flen_kernel(M, F, D),
        out_shape=jax.ShapeDtypeStruct((Bp, out_dim), jnp.float32),
        grid=(Bp // TB,),
        in_specs=in_specs,
        out_specs=pl.BlockSpec((TB, out_dim), lambda i: (i, 0)),
        compiler_params=pltpu.CompilerParams(
            dimension_semantics=("parallel",),               # megacore split on v7x
            vmem_limit_bytes=48 * 1024 * 1024),              # under v7x's 64 MiB VMEM
    )(*xs, extra,
      params["kernel_mf"], params["kernel_fm"], bias_fwbi,
      *w1_chunks, params["b1"],
      wp_fwbi, wp_dnn, wp_extra, params["bp"])
    return out[:B]


def flen_reference(inputs_list, extra, params):
    """Plain-JAX f32 reference mirroring the PyTorch forward (concat + single matmul)."""
    M = len(inputs_list)
    fv = [jnp.sum(t, axis=1) for t in inputs_list]
    h_mf = 0.0
    for p, (i, j) in enumerate(itertools.combinations(range(M), 2)):
        h_mf = h_mf + fv[i] * fv[j] * params["kernel_mf"][p]
    h_mf = h_mf + params["bias_mf"]
    h_fm = 0.0
    for m, t in enumerate(inputs_list):
        h_fm = h_fm + (fv[m] * fv[m] - jnp.sum(t * t, axis=1)) * params["kernel_fm"][m]
    h_fm = h_fm + params["bias_fm"]
    fwbi = h_mf + h_fm
    B = inputs_list[0].shape[0]
    flat = jnp.concatenate(inputs_list, axis=1).reshape(B, -1)
    dnn = jax.nn.relu(flat @ params["w1"] + params["b1"])
    combined = jnp.concatenate([fwbi, dnn, extra], axis=-1)
    return combined @ params["wp"] + params["bp"]


if __name__ == "__main__":
    # Small shapes consistent with the module's forward contract.
    B, M, F, D = 4, 3, 4, 8      # batch, field groups, fields per group, dim_1
    dim2 = 6                     # wide (extra) feature dim
    H = 16                       # hidden_units = [16]
    OUT = 1                      # projection_hidden_units = [1]
    P = M * (M - 1) // 2

    key = jax.random.PRNGKey(0)
    k = jax.random.split(key, 8)

    inputs_list = [jax.random.normal(k[m], (B, F, D), jnp.float32) for m in range(M)]
    extra = jax.random.normal(k[3], (B, dim2), jnp.float32)

    dnn_in = M * F * D           # dnn_in_shape
    proj_in = D + H + dim2       # projection_in_shape

    params = {
        # FieldWiseBiInterationLayer params (torch init: ones / 0.5 / zeros)
        "kernel_mf": jnp.ones((P,), jnp.float32),
        "kernel_fm": jnp.full((M,), 0.5, jnp.float32),
        "bias_mf": jnp.zeros((1, D), jnp.float32),
        "bias_fm": jnp.zeros((1, D), jnp.float32),
        # DNNLayer (hidden_units=[16], relu)
        "w1": (jax.random.normal(k[4], (dnn_in, H), jnp.float32) * 0.05),
        "b1": jnp.zeros((1, H), jnp.float32),
        # Projection layer (hidden_units=[1], apply_final_act=False)
        "wp": (jax.random.normal(k[5], (proj_in, OUT), jnp.float32) * 0.1),
        "bp": jnp.zeros((1, OUT), jnp.float32),
    }

    out = flen_forward(inputs_list, extra, params)
    out = jax.block_until_ready(out)

    ref = jax.block_until_ready(flen_reference(inputs_list, extra, params))
    assert out.shape == (B, OUT), out.shape
    # bf16 DNN-path operands with f32 accumulation vs f32 reference: ~1e-3 abs error.
    assert jnp.allclose(out, ref, rtol=2e-2, atol=2e-2), (out, ref)

    print("KERNEL_OK")
</pallas_src>

<mosaic_0001>
module attributes {stable_mosaic.version = 11 : i64} {
  func.func @kernel(%arg0: i32, %arg1: memref<8x32xf32, #tpu.memory_space<vmem>>, %arg2: memref<8x32xf32, #tpu.memory_space<vmem>>, %arg3: memref<8x32xf32, #tpu.memory_space<vmem>>, %arg4: memref<8x6xf32, #tpu.memory_space<vmem>>, %arg5: memref<3xf32, #tpu.memory_space<smem>>, %arg6: memref<3xf32, #tpu.memory_space<smem>>, %arg7: memref<1x8xf32, #tpu.memory_space<vmem>>, %arg8: memref<32x16xbf16, #tpu.memory_space<vmem>>, %arg9: memref<32x16xbf16, #tpu.memory_space<vmem>>, %arg10: memref<32x16xbf16, #tpu.memory_space<vmem>>, %arg11: memref<1x16xf32, #tpu.memory_space<vmem>>, %arg12: memref<1x8xf32, #tpu.memory_space<vmem>>, %arg13: memref<1x16xf32, #tpu.memory_space<vmem>>, %arg14: memref<1x6xf32, #tpu.memory_space<vmem>>, %arg15: memref<1x1xf32, #tpu.memory_space<vmem>>, %arg16: memref<8x1xf32, #tpu.memory_space<vmem>>) attributes {dimension_semantics = [#tpu.dimension_semantics<parallel>], iteration_bounds = array<i64: 1>, scalar_prefetch = 0 : i64, scratch_operands = 0 : i64, tpu.core_type = #tpu.core_type<tc>, window_params = [{transform_indices = @transform_0, window_bounds = array<i64: 8, 32>}, {transform_indices = @transform_1, window_bounds = array<i64: 8, 32>}, {transform_indices = @transform_2, window_bounds = array<i64: 8, 32>}, {transform_indices = @transform_3, window_bounds = array<i64: 8, 6>}, {transform_indices = @transform_4, window_bounds = array<i64: 3>}, {transform_indices = @transform_5, window_bounds = array<i64: 3>}, {pipeline_mode = #tpu.pipeline_mode<synchronous>, transform_indices = @transform_6, window_bounds = array<i64: 1, 8>}, {pipeline_mode = #tpu.pipeline_mode<synchronous>, transform_indices = @transform_7, window_bounds = array<i64: 32, 16>}, {pipeline_mode = #tpu.pipeline_mode<synchronous>, transform_indices = @transform_8, window_bounds = array<i64: 32, 16>}, {pipeline_mode = #tpu.pipeline_mode<synchronous>, transform_indices = @transform_9, window_bounds = array<i64: 32, 16>}, {pipeline_mode = #tpu.pipeline_mode<synchronous>, transform_indices = @transform_10, window_bounds = array<i64: 1, 16>}, {pipeline_mode = #tpu.pipeline_mode<synchronous>, transform_indices = @transform_11, window_bounds = array<i64: 1, 8>}, {pipeline_mode = #tpu.pipeline_mode<synchronous>, transform_indices = @transform_12, window_bounds = array<i64: 1, 16>}, {pipeline_mode = #tpu.pipeline_mode<synchronous>, transform_indices = @transform_13, window_bounds = array<i64: 1, 6>}, {pipeline_mode = #tpu.pipeline_mode<synchronous>, transform_indices = @transform_14, window_bounds = array<i64: 1, 1>}, {transform_indices = @transform_15, window_bounds = array<i64: 8, 1>}]} {
    %c0 = arith.constant 0 : index
    %c0_0 = arith.constant 0 : index
    %0 = vector.load %arg1[%c0, %c0_0] : memref<8x32xf32, #tpu.memory_space<vmem>>, vector<8x32xf32>
    %1 = vector.extract_strided_slice %0 {offsets = [0, 0], sizes = [8, 8], strides = [1, 1]} : vector<8x32xf32> to vector<8x8xf32>
    %2 = arith.mulf %1, %1 : vector<8x8xf32>
    %3 = vector.extract_strided_slice %0 {offsets = [0, 8], sizes = [8, 8], strides = [1, 1]} : vector<8x32xf32> to vector<8x8xf32>
    %4 = arith.addf %1, %3 : vector<8x8xf32>
    %5 = arith.mulf %3, %3 : vector<8x8xf32>
    %6 = arith.addf %2, %5 : vector<8x8xf32>
    %7 = vector.extract_strided_slice %0 {offsets = [0, 16], sizes = [8, 8], strides = [1, 1]} : vector<8x32xf32> to vector<8x8xf32>
    %8 = arith.addf %4, %7 : vector<8x8xf32>
    %9 = arith.mulf %7, %7 : vector<8x8xf32>
    %10 = arith.addf %6, %9 : vector<8x8xf32>
    %11 = vector.extract_strided_slice %0 {offsets = [0, 24], sizes = [8, 8], strides = [1, 1]} : vector<8x32xf32> to vector<8x8xf32>
    %12 = arith.addf %8, %11 : vector<8x8xf32>
    %13 = arith.mulf %11, %11 : vector<8x8xf32>
    %14 = arith.addf %10, %13 : vector<8x8xf32>
    %15 = arith.mulf %12, %12 : vector<8x8xf32>
    %16 = arith.subf %15, %14 : vector<8x8xf32>
    %c0_1 = arith.constant 0 : index
    %17 = memref.load %arg6[%c0_1] : memref<3xf32, #tpu.memory_space<smem>>
    %18 = vector.broadcast %17 : f32 to vector<8x8xf32>
    %19 = arith.mulf %16, %18 : vector<8x8xf32>
    %20 = arith.truncf %0 : vector<8x32xf32> to vector<8x32xbf16>
    %c0_2 = arith.constant 0 : index
    %c0_3 = arith.constant 0 : index
    %21 = vector.load %arg8[%c0_2, %c0_3] : memref<32x16xbf16, #tpu.memory_space<vmem>>, vector<32x16xbf16>
    %cst = arith.constant dense<0.000000e+00> : vector<8x16xf32>
    %22 = tpu.matmul %20, %21, %cst {dimension_numbers = #tpu.dot_dimension_numbers<[1], [0], [0], [1], [0, 0, 1, 1], [], []>} : vector<8x32xbf16>, vector<32x16xbf16>, vector<8x16xf32> -> vector<8x16xf32>
    %c0_4 = arith.constant 0 : index
    %c0_5 = arith.constant 0 : index
    %23 = vector.load %arg2[%c0_4, %c0_5] : memref<8x32xf32, #tpu.memory_space<vmem>>, vector<8x32xf32>
    %24 = vector.extract_strided_slice %23 {offsets = [0, 0], sizes = [8, 8], strides = [1, 1]} : vector<8x32xf32> to vector<8x8xf32>
    %25 = arith.mulf %24, %24 : vector<8x8xf32>
    %26 = vector.extract_strided_slice %23 {offsets = [0, 8], sizes = [8, 8], strides = [1, 1]} : vector<8x32xf32> to vector<8x8xf32>
    %27 = arith.addf %24, %26 : vector<8x8xf32>
    %28 = arith.mulf %26, %26 : vector<8x8xf32>
    %29 = arith.addf %25, %28 : vector<8x8xf32>
    %30 = vector.extract_strided_slice %23 {offsets = [0, 16], sizes = [8, 8], strides = [1, 1]} : vector<8x32xf32> to vector<8x8xf32>
    %31 = arith.addf %27, %30 : vector<8x8xf32>
    %32 = arith.mulf %30, %30 : vector<8x8xf32>
    %33 = arith.addf %29, %32 : vector<8x8xf32>
    %34 = vector.extract_strided_slice %23 {offsets = [0, 24], sizes = [8, 8], strides = [1, 1]} : vector<8x32xf32> to vector<8x8xf32>
    %35 = arith.addf %31, %34 : vector<8x8xf32>
    %36 = arith.mulf %34, %34 : vector<8x8xf32>
    %37 = arith.addf %33, %36 : vector<8x8xf32>
    %38 = arith.mulf %35, %35 : vector<8x8xf32>
    %39 = arith.subf %38, %37 : vector<8x8xf32>
    %c1 = arith.constant 1 : index
    %40 = memref.load %arg6[%c1] : memref<3xf32, #tpu.memory_space<smem>>
    %41 = vector.broadcast %40 : f32 to vector<8x8xf32>
    %42 = arith.mulf %39, %41 : vector<8x8xf32>
    %43 = arith.addf %19, %42 : vector<8x8xf32>
    %44 = arith.truncf %23 : vector<8x32xf32> to vector<8x32xbf16>
    %c0_6 = arith.constant 0 : index
    %c0_7 = arith.constant 0 : index
    %45 = vector.load %arg9[%c0_6, %c0_7] : memref<32x16xbf16, #tpu.memory_space<vmem>>, vector<32x16xbf16>
    %cst_8 = arith.constant dense<0.000000e+00> : vector<8x16xf32>
    %46 = tpu.matmul %44, %45, %cst_8 {dimension_numbers = #tpu.dot_dimension_numbers<[1], [0], [0], [1], [0, 0, 1, 1], [], []>} : vector<8x32xbf16>, vector<32x16xbf16>, vector<8x16xf32> -> vector<8x16xf32>
    %47 = arith.addf %22, %46 : vector<8x16xf32>
    %c0_9 = arith.constant 0 : index
    %c0_10 = arith.constant 0 : index
    %48 = vector.load %arg3[%c0_9, %c0_10] : memref<8x32xf32, #tpu.memory_space<vmem>>, vector<8x32xf32>
    %49 = vector.extract_strided_slice %48 {offsets = [0, 0], sizes = [8, 8], strides = [1, 1]} : vector<8x32xf32> to vector<8x8xf32>
    %50 = arith.mulf %49, %49 : vector<8x8xf32>
    %51 = vector.extract_strided_slice %48 {offsets = [0, 8], sizes = [8, 8], strides = [1, 1]} : vector<8x32xf32> to vector<8x8xf32>
    %52 = arith.addf %49, %51 : vector<8x8xf32>
    %53 = arith.mulf %51, %51 : vector<8x8xf32>
    %54 = arith.addf %50, %53 : vector<8x8xf32>
    %55 = vector.extract_strided_slice %48 {offsets = [0, 16], sizes = [8, 8], strides = [1, 1]} : vector<8x32xf32> to vector<8x8xf32>
    %56 = arith.addf %52, %55 : vector<8x8xf32>
    %57 = arith.mulf %55, %55 : vector<8x8xf32>
    %58 = arith.addf %54, %57 : vector<8x8xf32>
    %59 = vector.extract_strided_slice %48 {offsets = [0, 24], sizes = [8, 8], strides = [1, 1]} : vector<8x32xf32> to vector<8x8xf32>
    %60 = arith.addf %56, %59 : vector<8x8xf32>
    %61 = arith.mulf %59, %59 : vector<8x8xf32>
    %62 = arith.addf %58, %61 : vector<8x8xf32>
    %63 = arith.mulf %60, %60 : vector<8x8xf32>
    %64 = arith.subf %63, %62 : vector<8x8xf32>
    %c2 = arith.constant 2 : index
    %65 = memref.load %arg6[%c2] : memref<3xf32, #tpu.memory_space<smem>>
    %66 = vector.broadcast %65 : f32 to vector<8x8xf32>
    %67 = arith.mulf %64, %66 : vector<8x8xf32>
    %68 = arith.addf %43, %67 : vector<8x8xf32>
    %69 = arith.truncf %48 : vector<8x32xf32> to vector<8x32xbf16>
    %c0_11 = arith.constant 0 : index
    %c0_12 = arith.constant 0 : index
    %70 = vector.load %arg10[%c0_11, %c0_12] : memref<32x16xbf16, #tpu.memory_space<vmem>>, vector<32x16xbf16>
    %cst_13 = arith.constant dense<0.000000e+00> : vector<8x16xf32>
    %71 = tpu.matmul %69, %70, %cst_13 {dimension_numbers = #tpu.dot_dimension_numbers<[1], [0], [0], [1], [0, 0, 1, 1], [], []>} : vector<8x32xbf16>, vector<32x16xbf16>, vector<8x16xf32> -> vector<8x16xf32>
    %72 = arith.addf %47, %71 : vector<8x16xf32>
    %cst_14 = arith.constant 0.000000e+00 : f32
    %73 = vector.broadcast %cst_14 : f32 to vector<8x8xf32>
    %74 = arith.mulf %12, %35 : vector<8x8xf32>
    %c0_15 = arith.constant 0 : index
    %75 = memref.load %arg5[%c0_15] : memref<3xf32, #tpu.memory_space<smem>>
    %76 = vector.broadcast %75 : f32 to vector<8x8xf32>
    %77 = arith.mulf %74, %76 : vector<8x8xf32>
    %78 = arith.addf %73, %77 : vector<8x8xf32>
    %79 = arith.mulf %12, %60 : vector<8x8xf32>
    %c1_16 = arith.constant 1 : index
    %80 = memref.load %arg5[%c1_16] : memref<3xf32, #tpu.memory_space<smem>>
    %81 = vector.broadcast %80 : f32 to vector<8x8xf32>
    %82 = arith.mulf %79, %81 : vector<8x8xf32>
    %83 = arith.addf %78, %82 : vector<8x8xf32>
    %84 = arith.mulf %35, %60 : vector<8x8xf32>
    %c2_17 = arith.constant 2 : index
    %85 = memref.load %arg5[%c2_17] : memref<3xf32, #tpu.memory_space<smem>>
    %86 = vector.broadcast %85 : f32 to vector<8x8xf32>
    %87 = arith.mulf %84, %86 : vector<8x8xf32>
    %88 = arith.addf %83, %87 : vector<8x8xf32>
    %89 = arith.addf %88, %68 : vector<8x8xf32>
    %c0_18 = arith.constant 0 : index
    %c0_19 = arith.constant 0 : index
    %90 = vector.load %arg7[%c0_18, %c0_19] : memref<1x8xf32, #tpu.memory_space<vmem>>, vector<1x8xf32>
    %91 = vector.broadcast %90 : vector<1x8xf32> to vector<8x8xf32>
    %92 = arith.addf %89, %91 : vector<8x8xf32>
    %c0_20 = arith.constant 0 : index
    %c0_21 = arith.constant 0 : index
    %93 = vector.load %arg11[%c0_20, %c0_21] : memref<1x16xf32, #tpu.memory_space<vmem>>, vector<1x16xf32>
    %94 = vector.broadcast %93 : vector<1x16xf32> to vector<8x16xf32>
    %95 = arith.addf %72, %94 : vector<8x16xf32>
    %cst_22 = arith.constant 0.000000e+00 : f32
    %96 = vector.broadcast %cst_22 : f32 to vector<8x16xf32>
    %97 = arith.maximumf %95, %96 : vector<8x16xf32>
    %c0_23 = arith.constant 0 : index
    %c0_24 = arith.constant 0 : index
    %98 = vector.load %arg12[%c0_23, %c0_24] : memref<1x8xf32, #tpu.memory_space<vmem>>, vector<1x8xf32>
    %99 = vector.broadcast %98 : vector<1x8xf32> to vector<8x8xf32>
    %100 = arith.mulf %92, %99 : vector<8x8xf32>
    %cst_25 = arith.constant dense<0.000000e+00> : vector<8xf32>
    %101 = vector.multi_reduction <add>, %100, %cst_25 [1] : vector<8x8xf32> to vector<8xf32>
    %102 = vector.shape_cast %101 : vector<8xf32> to vector<8x1xf32>
    %c0_26 = arith.constant 0 : index
    %c0_27 = arith.constant 0 : index
    %103 = vector.load %arg13[%c0_26, %c0_27] : memref<1x16xf32, #tpu.memory_space<vmem>>, vector<1x16xf32>
    %104 = vector.broadcast %103 : vector<1x16xf32> to vector<8x16xf32>
    %105 = arith.mulf %97, %104 : vector<8x16xf32>
    %cst_28 = arith.constant dense<0.000000e+00> : vector<8xf32>
    %106 = vector.multi_reduction <add>, %105, %cst_28 [1] : vector<8x16xf32> to vector<8xf32>
    %107 = vector.shape_cast %106 : vector<8xf32> to vector<8x1xf32>
    %108 = arith.addf %102, %107 : vector<8x1xf32>
    %c0_29 = arith.constant 0 : index
    %c0_30 = arith.constant 0 : index
    %109 = vector.load %arg4[%c0_29, %c0_30] : memref<8x6xf32, #tpu.memory_space<vmem>>, vector<8x6xf32>
    %c0_31 = arith.constant 0 : index
    %c0_32 = arith.constant 0 : index
    %110 = vector.load %arg14[%c0_31, %c0_32] : memref<1x6xf32, #tpu.memory_space<vmem>>, vector<1x6xf32>
    %111 = vector.broadcast %110 : vector<1x6xf32> to vector<8x6xf32>
    %112 = arith.mulf %109, %111 : vector<8x6xf32>
    %cst_33 = arith.constant dense<0.000000e+00> : vector<8xf32>
    %113 = vector.multi_reduction <add>, %112, %cst_33 [1] : vector<8x6xf32> to vector<8xf32>
    %114 = vector.shape_cast %113 : vector<8xf32> to vector<8x1xf32>
    %115 = arith.addf %108, %114 : vector<8x1xf32>
    %c0_34 = arith.constant 0 : index
    %c0_35 = arith.constant 0 : index
    %116 = vector.load %arg15[%c0_34, %c0_35] : memref<1x1xf32, #tpu.memory_space<vmem>>, vector<1x1xf32>
    %117 = vector.broadcast %116 : vector<1x1xf32> to vector<8x1xf32>
    %118 = arith.addf %115, %117 : vector<8x1xf32>
    %c0_36 = arith.constant 0 : index
    %c0_37 = arith.constant 0 : index
    %119 = vector.load %arg16[%c0_36, %c0_37] : memref<8x1xf32, #tpu.memory_space<vmem>>, vector<8x1xf32>
    tpu.vector_store %arg16[%c0_36, %c0_37], %118 {strides = array<i32>} : memref<8x1xf32, #tpu.memory_space<vmem>>, vector<8x1xf32>,
    return
  }
  func.func @transform_0(%arg0: i32) -> (i32, i32) {
    %c0_i32 = arith.constant 0 : i32
    %c0_i32_0 = arith.constant 0 : i32
    return %arg0, %c0_i32 : i32, i32
  }
  func.func @transform_1(%arg0: i32) -> (i32, i32) {
    %c0_i32 = arith.constant 0 : i32
    %c0_i32_0 = arith.constant 0 : i32
    return %arg0, %c0_i32 : i32, i32
  }
  func.func @transform_2(%arg0: i32) -> (i32, i32) {
    %c0_i32 = arith.constant 0 : i32
    %c0_i32_0 = arith.constant 0 : i32
    return %arg0, %c0_i32 : i32, i32
  }
  func.func @transform_3(%arg0: i32) -> (i32, i32) {
    %c0_i32 = arith.constant 0 : i32
    %c0_i32_0 = arith.constant 0 : i32
    return %arg0, %c0_i32 : i32, i32
  }
  func.func @transform_4(%arg0: i32) -> i32 {
    %c0_i32 = arith.constant 0 : i32
    %c0_i32_0 = arith.constant 0 : i32
    return %c0_i32 : i32
  }
  func.func @transform_5(%arg0: i32) -> i32 {
    %c0_i32 = arith.constant 0 : i32
    %c0_i32_0 = arith.constant 0 : i32
    return %c0_i32 : i32
  }
  func.func @transform_6(%arg0: i32) -> (i32, i32) {
    %c0_i32 = arith.constant 0 : i32
    %c0_i32_0 = arith.constant 0 : i32
    %c0_i32_1 = arith.constant 0 : i32
    return %c0_i32, %c0_i32_0 : i32, i32
  }
  func.func @transform_7(%arg0: i32) -> (i32, i32) {
    %c0_i32 = arith.constant 0 : i32
    %c0_i32_0 = arith.constant 0 : i32
    %c0_i32_1 = arith.constant 0 : i32
    return %c0_i32, %c0_i32_0 : i32, i32
  }
  func.func @transform_8(%arg0: i32) -> (i32, i32) {
    %c0_i32 = arith.constant 0 : i32
    %c0_i32_0 = arith.constant 0 : i32
    %c0_i32_1 = arith.constant 0 : i32
    return %c0_i32, %c0_i32_0 : i32, i32
  }
  func.func @transform_9(%arg0: i32) -> (i32, i32) {
    %c0_i32 = arith.constant 0 : i32
    %c0_i32_0 = arith.constant 0 : i32
    %c0_i32_1 = arith.constant 0 : i32
    return %c0_i32, %c0_i32_0 : i32, i32
  }
  func.func @transform_10(%arg0: i32) -> (i32, i32) {
    %c0_i32 = arith.constant 0 : i32
    %c0_i32_0 = arith.constant 0 : i32
    %c0_i32_1 = arith.constant 0 : i32
    return %c0_i32, %c0_i32_0 : i32, i32
  }
  func.func @transform_11(%arg0: i32) -> (i32, i32) {
    %c0_i32 = arith.constant 0 : i32
    %c0_i32_0 = arith.constant 0 : i32
    %c0_i32_1 = arith.constant 0 : i32
    return %c0_i32, %c0_i32_0 : i32, i32
  }
  func.func @transform_12(%arg0: i32) -> (i32, i32) {
    %c0_i32 = arith.constant 0 : i32
    %c0_i32_0 = arith.constant 0 : i32
    %c0_i32_1 = arith.constant 0 : i32
    return %c0_i32, %c0_i32_0 : i32, i32
  }
  func.func @transform_13(%arg0: i32) -> (i32, i32) {
    %c0_i32 = arith.constant 0 : i32
    %c0_i32_0 = arith.constant 0 : i32
    %c0_i32_1 = arith.constant 0 : i32
    return %c0_i32, %c0_i32_0 : i32, i32
  }
  func.func @transform_14(%arg0: i32) -> (i32, i32) {
    %c0_i32 = arith.constant 0 : i32
    %c0_i32_0 = arith.constant 0 : i32
    %c0_i32_1 = arith.constant 0 : i32
    return %c0_i32, %c0_i32_0 : i32, i32
  }
  func.func @transform_15(%arg0: i32) -> (i32, i32) {
    %c0_i32 = arith.constant 0 : i32
    %c0_i32_0 = arith.constant 0 : i32
    return %arg0, %c0_i32 : i32, i32
  }
}

</mosaic_0001>

<llo_original>
// kernel: tpu_custom_call.1
$region0: #{tpu_custom_call.1}
  #allocation0 [shape = 'u32[]', space=smem, size = 0x4, offset = 0x4, fixed_abs, tag = 'smem constant byte address 0x4 - core index']
  #allocation1 [shape = 'u32[72,128]{1,0:T(1,128)}', space=vmem, size = 0x9000, scoped, tag = 'internal scratch']
  #allocation2 [shape = 'f32[1,1]{1,0:T(1,128)S(1)}', space=vmem, size = 0x200, scoped, tag = 'scoped memory for tpu_custom_call.1']
  %s0 = inlined_call_operand.vmem [shape: f32[8,32], index: 0, kind: input, shape index: {}]
  %s1 = inlined_call_operand.vmem [shape: f32[8,32], index: 1, kind: input, shape index: {}]
  %s2 = inlined_call_operand.vmem [shape: f32[8,32], index: 2, kind: input, shape index: {}]
  %s3 = inlined_call_operand.vmem [shape: f32[8,6], index: 3, kind: input, shape index: {}]
  %s4 = inlined_call_operand.vmem [shape: f32[3], index: 4, kind: input, shape index: {}]
  %s5 = inlined_call_operand.vmem [shape: f32[3], index: 5, kind: input, shape index: {}]
  %s6 = inlined_call_operand.vmem [shape: f32[1,8], index: 6, kind: input, shape index: {}]
  %s7 = inlined_call_operand.vmem [shape: bf16[32,16], index: 7, kind: input, shape index: {}]
  %s8 = inlined_call_operand.vmem [shape: bf16[32,16], index: 8, kind: input, shape index: {}]
  %s9 = inlined_call_operand.vmem [shape: bf16[32,16], index: 9, kind: input, shape index: {}]
  %s10 = inlined_call_operand.vmem [shape: f32[1,16], index: 10, kind: input, shape index: {}]
  %s11 = inlined_call_operand.vmem [shape: f32[1,8], index: 11, kind: input, shape index: {}]
  %s12 = inlined_call_operand.vmem [shape: f32[1,16], index: 12, kind: input, shape index: {}]
  %s13 = inlined_call_operand.vmem [shape: f32[1,6], index: 13, kind: input, shape index: {}]
  %s14 = inlined_call_operand.<no memory space> [shape: f32[1,1], index: 14, kind: input, shape index: {}]
  %s15 = inlined_call_operand.vmem [shape: f32[8,1], index: 15, kind: output, shape index: {}]
  %s16 = sld [smem:[#allocation0]]
  $region78: #{tpu_custom_call.1} parent=0
    _
  %s18 = ssub.s32 1, %s16
  %s19 = scalar_select 0, %s18, %s16
  %v20 = vstv %s14
  %21 = vst [vmem:[#allocation2] sm:$0x1] %v20
  $region1: #{tpu_custom_call.1} parent=0
    #allocation3 [shape = 'u8[512]{0}', space=smem, size = 0x200, scoped, tag = 'input window, operand 4, single buffered']
    #allocation4 [shape = 's32[1]{0}', space=sflag, size = 0x4, scoped, tag = 'scoped memory for tpu_custom_call.1']
    #allocation5 [shape = 'u8[512]{0}', space=smem, size = 0x200, scoped, tag = 'input window, operand 5, single buffered']
    #allocation6 [shape = 's32[1]{0}', space=sflag, size = 0x4, scoped, tag = 'scoped memory for tpu_custom_call.1']
    %22 = vsyncpa [#allocation4], 0
    %23 = vsyncpa [#allocation6], 0
    // Predicated region
    $region2: #{tpu_custom_call.1} parent=1 // pred_check
      _
    $region3: #{tpu_custom_call.1} parent=1 // pred_check_branch
      %25 = sbr.rel (0) target = $region5
    $region4: #{tpu_custom_call.1} parent=1 // pred_region
      _
    $region5: #{tpu_custom_call.1} parent=1 // pred_fallthru
      _
    // Predicated region
    $region6: #{tpu_custom_call.1} parent=1 // pred_check
      _
    $region7: #{tpu_custom_call.1} parent=1 // pred_check_branch
      %27 = sbr.rel (0) target = $region9
    $region8: #{tpu_custom_call.1} parent=1 // pred_region
      _
    $region9: #{tpu_custom_call.1} parent=1 // pred_fallthru
      _
    // Predicated region
    $region10: #{tpu_custom_call.1} parent=1 // pred_check
      _
    $region11: #{tpu_custom_call.1} parent=1 // pred_check_branch
      %29 = sbr.rel (0) target = $region13
    $region12: #{tpu_custom_call.1} parent=1 // pred_region
      _
    $region13: #{tpu_custom_call.1} parent=1 // pred_fallthru
      _
    // Predicated region
    $region14: #{tpu_custom_call.1} parent=1 // pred_check
      _
    $region15: #{tpu_custom_call.1} parent=1 // pred_check_branch
      %31 = sbr.rel (0) target = $region17
    $region16: #{tpu_custom_call.1} parent=1 // pred_region
      _
    $region17: #{tpu_custom_call.1} parent=1 // pred_fallthru
      _
    // Predicated region
    $region18: #{tpu_custom_call.1} parent=1 // pred_check
      _
    $region19: #{tpu_custom_call.1} parent=1 // pred_check_branch
      %33 = sbr.rel (0) target = $region21
    $region20: #{tpu_custom_call.1} parent=1 // pred_region
      %35 = vsyncadd [#allocation4], 0
      %s37 = sshll.u32 %s4, 4
      %s38 = int_to_ptr.vmem [resolvable:$true] %s37
      %40 = dma.vmem_to_smem %s38, 16, [#allocation3], [#allocation4]
    $region21: #{tpu_custom_call.1} parent=1 // pred_fallthru
      _
    // Predicated region
    $region22: #{tpu_custom_call.1} parent=1 // pred_check
      _
    $region23: #{tpu_custom_call.1} parent=1 // pred_check_branch
      %42 = sbr.rel (0) target = $region25
    $region24: #{tpu_custom_call.1} parent=1 // pred_region
      %44 = vsyncadd [#allocation6], 0
      %s46 = sshll.u32 %s5, 4
      %s47 = int_to_ptr.vmem [resolvable:$true] %s46
      %49 = dma.vmem_to_smem %s47, 16, [#allocation5], [#allocation6]
    $region25: #{tpu_custom_call.1} parent=1 // pred_fallthru
      _
    // Predicated region
    $region26: #{tpu_custom_call.1} parent=1 // pred_check
      _
    $region27: #{tpu_custom_call.1} parent=1 // pred_check_branch
      %51 = sbr.rel (0) target = $region29
    $region28: #{tpu_custom_call.1} parent=1 // pred_region
      _
    $region29: #{tpu_custom_call.1} parent=1 // pred_fallthru
      _
    // Predicated region
    $region30: #{tpu_custom_call.1} parent=1 // pred_check
      _
    $region31: #{tpu_custom_call.1} parent=1 // pred_check_branch
      %53 = sbr.rel (0) target = $region33
    $region32: #{tpu_custom_call.1} parent=1 // pred_region
      _
    $region33: #{tpu_custom_call.1} parent=1 // pred_fallthru
      _
    // Predicated region
    $region34: #{tpu_custom_call.1} parent=1 // pred_check
      _
    $region35: #{tpu_custom_call.1} parent=1 // pred_check_branch
      %55 = sbr.rel (0) target = $region37
    $region36: #{tpu_custom_call.1} parent=1 // pred_region
      _
    $region37: #{tpu_custom_call.1} parent=1 // pred_fallthru
      _
    // Predicated region
    $region38: #{tpu_custom_call.1} parent=1 // pred_check
      _
    $region39: #{tpu_custom_call.1} parent=1 // pred_check_branch
      %57 = sbr.rel (0) target = $region41
    $region40: #{tpu_custom_call.1} parent=1 // pred_region
      _
    $region41: #{tpu_custom_call.1} parent=1 // pred_fallthru
      _
    // Predicated region
    $region42: #{tpu_custom_call.1} parent=1 // pred_check
      _
    $region43: #{tpu_custom_call.1} parent=1 // pred_check_branch
      %59 = sbr.rel (0) target = $region45
    $region44: #{tpu_custom_call.1} parent=1 // pred_region
      _
    $region45: #{tpu_custom_call.1} parent=1 // pred_fallthru
      _
    // Predicated region
    $region46: #{tpu_custom_call.1} parent=1 // pred_check
      _
    $region47: #{tpu_custom_call.1} parent=1 // pred_check_branch
      %61 = sbr.rel (0) target = $region49
    $region48: #{tpu_custom_call.1} parent=1 // pred_region
      _
    $region49: #{tpu_custom_call.1} parent=1 // pred_fallthru
      _
    // Predicated region
    $region50: #{tpu_custom_call.1} parent=1 // pred_check
      _
    $region51: #{tpu_custom_call.1} parent=1 // pred_check_branch
      %63 = sbr.rel (0) target = $region53
    $region52: #{tpu_custom_call.1} parent=1 // pred_region
      _
    $region53: #{tpu_custom_call.1} parent=1 // pred_fallthru
      _
    // Predicated region
    $region54: #{tpu_custom_call.1} parent=1 // pred_check
      _
    $region55: #{tpu_custom_call.1} parent=1 // pred_check_branch
      %65 = sbr.rel (0) target = $region57
    $region56: #{tpu_custom_call.1} parent=1 // pred_region
      _
    $region57: #{tpu_custom_call.1} parent=1 // pred_fallthru
      _
    // Predicated region
    $region58: #{tpu_custom_call.1} parent=1 // pred_check
      _
    $region59: #{tpu_custom_call.1} parent=1 // pred_check_branch
      %67 = sbr.rel (0) target = $region61
    $region60: #{tpu_custom_call.1} parent=1 // pred_region
      _
    $region61: #{tpu_custom_call.1} parent=1 // pred_fallthru
      _
    // Predicated region
    $region62: #{tpu_custom_call.1} parent=1 // pred_check
      _
    $region63: #{tpu_custom_call.1} parent=1 // pred_check_branch
      %69 = sbr.rel (0) target = $region65
    $region64: #{tpu_custom_call.1} parent=1 // pred_region
      %71 = dma.done [#allocation4], 16
    $region65: #{tpu_custom_call.1} parent=1 // pred_fallthru
      _
    // Predicated region
    $region66: #{tpu_custom_call.1} parent=1 // pred_check
      _
    $region67: #{tpu_custom_call.1} parent=1 // pred_check_branch
      %73 = sbr.rel (0) target = $region69
    $region68: #{tpu_custom_call.1} parent=1 // pred_region
      %75 = dma.done [#allocation6], 16
    $region69: #{tpu_custom_call.1} parent=1 // pred_fallthru
      _
    %76 = sfence
    %v78 = vld [vmem:[%s0] sm:$0xff]
    %v79 = vmul.f32 %v78, %v78
    %81 = vrot.lane.b32.xlu0 %v78, 120
    %v82 = vpop.permute.xlu0 %81
    %v84 = vadd.f32 %v78, %v82
    %86 = vrot.lane.b32.xlu0 %v79, 120
    %v87 = vpop.permute.xlu0 %86
    %v89 = vadd.f32 %v79, %v87
    %90 = vrot.lane.b32.xlu0 %v78, 112
    %v91 = vpop.permute.xlu0 %90
    %v93 = vadd.f32 %v84, %v91
    %94 = vrot.lane.b32.xlu0 %v79, 112
    %v95 = vpop.permute.xlu0 %94
    %v97 = vadd.f32 %v89, %v95
    %98 = vrot.lane.b32.xlu0 %v78, 104
    %v99 = vpop.permute.xlu0 %98
    %v101 = vadd.f32 %v93, %v99
    %102 = vrot.lane.b32.xlu0 %v79, 104
    %v103 = vpop.permute.xlu0 %102
    %v105 = vadd.f32 %v97, %v103
    %v106 = vmul.f32 %v101, %v101
    %v107 = vsub.f32 %v106, %v105
    %s108 = sld [smem:[#allocation5]]
    %v109 = vstv %s108
    %v110 = vmul.f32 %v107, %v109
    %v111 = vpack.c.bf16 %v78, %v78
    %v112 = vld [vmem:[%s7] sm:$0xf]
    %v113 = vld [vmem:[%s7 + $0x4] sm:$0xf]
    %v114 = vld [vmem:[%s7 + $0x8] sm:$0xf]
    %v115 = vld [vmem:[%s7 + $0xc] sm:$0xf]
    %v116 = vld [vmem:[%s1] sm:$0xff]
    %v117 = vmul.f32 %v116, %v116
    %119 = vrot.lane.b32.xlu0 %v116, 120
    %v120 = vpop.permute.xlu0 %119
    %v122 = vadd.f32 %v116, %v120
    %124 = vrot.lane.b32.xlu0 %v117, 120
    %v125 = vpop.permute.xlu0 %124
    %v127 = vadd.f32 %v117, %v125
    %128 = vrot.lane.b32.xlu0 %v116, 112
    %v129 = vpop.permute.xlu0 %128
    %v131 = vadd.f32 %v122, %v129
    %132 = vrot.lane.b32.xlu0 %v117, 112
    %v133 = vpop.permute.xlu0 %132
    %v135 = vadd.f32 %v127, %v133
    %136 = vrot.lane.b32.xlu0 %v116, 104
    %v137 = vpop.permute.xlu0 %136
    %v139 = vadd.f32 %v131, %v137
    %140 = vrot.lane.b32.xlu0 %v117, 104
    %v141 = vpop.permute.xlu0 %140
    %v143 = vadd.f32 %v135, %v141
    %v144 = vmul.f32 %v139, %v139
    %v145 = vsub.f32 %v144, %v143
    %s146 = sld [smem:[#allocation5 + $0x1]]
    %v147 = vstv %s146
    %v148 = vmul.f32 %v145, %v147
    %v149 = vadd.f32 %v110, %v148
    %v150 = vpack.c.bf16 %v116, %v116
    %v151 = vld [vmem:[%s8] sm:$0xf]
    %v152 = vld [vmem:[%s8 + $0x4] sm:$0xf]
    %v153 = vld [vmem:[%s8 + $0x8] sm:$0xf]
    %v154 = vld [vmem:[%s8 + $0xc] sm:$0xf]
    %v159 = vunpack.c.l.b16 %v151
    %v160 = vunpack.c.l.b16 %v152
    %v161 = vunpack.c.l.b16 %v153
    %v162 = vunpack.c.l.b16 %v154
    %v163 = vpack.c.b16 %v160, %v159
    %v164 = vpack.c.b16 %v162, %v161
    %vm167 = vcmask 261120
    %v169 = vsel %vm167, %v150, 0
    %171 = vmatpush.bf16.msra.mxu0 0
    %172 = vmatpush.bf16.msra.mxu0 0
    %173 = vmatpush.bf16.msra.mxu0 0
    %174 = vmatpush.bf16.msra.mxu0 0
    %175 = vmatpush.bf16.msra.mxu0 0
    %176 = vmatpush.bf16.msra.mxu0 0
    %177 = vmatpush.bf16.msra.mxu0 %v164
    %178 = vmatpush.bf16.msra.mxu0 %v163
    %179 = vmatmul.bf16.gmra.mxu0 %v169
    %v180 = vpop.f32.mrf.mxu0
    %v181 = vadd.f32 0.0, %v180
    %v182 = vpop.f32.mrf.mxu0
    %183 = vdwg.mxu0
    %v188 = vunpack.c.l.b16 %v112
    %v189 = vunpack.c.l.b16 %v113
    %v190 = vunpack.c.l.b16 %v114
    %v191 = vunpack.c.l.b16 %v115
    %v192 = vpack.c.b16 %v189, %v188
    %v193 = vpack.c.b16 %v191, %v190
    %v197 = vsel %vm167, %v111, 0
    %199 = vmatpush.bf16.msra.mxu0 0
    %200 = vmatpush.bf16.msra.mxu0 0
    %201 = vmatpush.bf16.msra.mxu0 0
    %202 = vmatpush.bf16.msra.mxu0 0
    %203 = vmatpush.bf16.msra.mxu0 0
    %204 = vmatpush.bf16.msra.mxu0 0
    %205 = vmatpush.bf16.msra.mxu0 %v193
    %206 = vmatpush.bf16.msra.mxu0 %v192
    %207 = vmatmul.bf16.gmra.mxu0 %v197
    %v208 = vpop.f32.mrf.mxu0
    %v209 = vadd.f32 %v181, %v208
    %v210 = vpop.f32.mrf.mxu0
    %211 = vdwg.mxu0
    %v212 = vld [vmem:[%s2] sm:$0xff]
    %v213 = vmul.f32 %v212, %v212
    %215 = vrot.lane.b32.xlu0 %v212, 120
    %v216 = vpop.permute.xlu0 %215
    %v218 = vadd.f32 %v212, %v216
    %220 = vrot.lane.b32.xlu0 %v213, 120
    %v221 = vpop.permute.xlu0 %220
    %v223 = vadd.f32 %v213, %v221
    %224 = vrot.lane.b32.xlu0 %v212, 112
    %v225 = vpop.permute.xlu0 %224
    %v227 = vadd.f32 %v218, %v225
    %228 = vrot.lane.b32.xlu0 %v213, 112
    %v229 = vpop.permute.xlu0 %228
    %v231 = vadd.f32 %v223, %v229
    %232 = vrot.lane.b32.xlu0 %v212, 104
    %v233 = vpop.permute.xlu0 %232
    %v235 = vadd.f32 %v227, %v233
    %236 = vrot.lane.b32.xlu0 %v213, 104
    %v237 = vpop.permute.xlu0 %236
    %v239 = vadd.f32 %v231, %v237
    %v240 = vmul.f32 %v235, %v235
    %v241 = vsub.f32 %v240, %v239
    %s242 = sld [smem:[#allocation5 + $0x2]]
    %v243 = vstv %s242
    %v244 = vmul.f32 %v241, %v243
    %v245 = vadd.f32 %v149, %v244
    %v246 = vpack.c.bf16 %v212, %v212
    %v247 = vld [vmem:[%s9] sm:$0xf]
    %v248 = vld [vmem:[%s9 + $0x4] sm:$0xf]
    %v249 = vld [vmem:[%s9 + $0x8] sm:$0xf]
    %v250 = vld [vmem:[%s9 + $0xc] sm:$0xf]
    %v255 = vunpack.c.l.b16 %v247
    %v256 = vunpack.c.l.b16 %v248
    %v257 = vunpack.c.l.b16 %v249
    %v258 = vunpack.c.l.b16 %v250
    %v259 = vpack.c.b16 %v256, %v255
    %v260 = vpack.c.b16 %v258, %v257
    %v264 = vsel %vm167, %v246, 0
    %266 = vmatpush.bf16.msra.mxu0 0
    %267 = vmatpush.bf16.msra.mxu0 0
    %268 = vmatpush.bf16.msra.mxu0 0
    %269 = vmatpush.bf16.msra.mxu0 0
    %270 = vmatpush.bf16.msra.mxu0 0
    %271 = vmatpush.bf16.msra.mxu0 0
    %272 = vmatpush.bf16.msra.mxu0 %v260
    %273 = vmatpush.bf16.msra.mxu0 %v259
    %274 = vmatmul.bf16.gmra.mxu0 %v264
    %v275 = vpop.f32.mrf.mxu0
    %v276 = vadd.f32 0.0, %v275
    %v277 = vpop.f32.mrf.mxu0
    %278 = vdwg.mxu0
    %v279 = vadd.f32 %v209, %v276
    %v280 = vmul.f32 %v101, %v139
    %s281 = sld [smem:[#allocation3]]
    %v282 = vstv %s281
    %v283 = vmul.f32 %v280, %v282
    %v284 = vadd.f32 %v283, 0.0
    %v285 = vmul.f32 %v101, %v235
    %s286 = sld [smem:[#allocation3 + $0x1]]
    %v287 = vstv %s286
    %v288 = vmul.f32 %v285, %v287
    %v289 = vadd.f32 %v284, %v288
    %v290 = vmul.f32 %v139, %v235
    %s291 = sld [smem:[#allocation3 + $0x2]]
    %v292 = vstv %s291
    %v293 = vmul.f32 %v290, %v292
    %v294 = vadd.f32 %v289, %v293
    %v295 = vadd.f32 %v294, %v245
    %v296 = vld [vmem:[%s6] sm:$0x1]
    %v298 = vperm.slane %v296, 0
    %v300 = vadd.f32 %v295, %v298
    %v301 = vld [vmem:[%s10] sm:$0x1]
    %v303 = vperm.slane %v301, 0
    %v305 = vadd.f32 %v279, %v303
    %v306 = vmax.f32 %v305, 0.0
    %v307 = vld [vmem:[%s11] sm:$0x1]
    %v309 = vperm.slane %v307, 0
    %v311 = vmul.f32 %v300, %v309
    %vm312 = vcmask 64512
    %v313 = vsel %vm312, %v311, 0.0
    %314 = vadd.xlane.f32.xlu0 %v313
    %v315 = vpop.xlane.xlu0 %314
    %v316 = vld [vmem:[%s12] sm:$0x1]
    %v318 = vperm.slane %v316, 0
    %v320 = vmul.f32 %v306, %v318
    %vm321 = vcmask 130048
    %v322 = vsel %vm321, %v320, 0.0
    %323 = vadd.xlane.f32.xlu0 %v322
    %v324 = vpop.xlane.xlu0 %323
    %v325 = vadd.f32 %v315, %v324
    %v326 = vld [vmem:[%s3] sm:$0xff]
    %v327 = vld [vmem:[%s13] sm:$0x1]
    %v329 = vperm.slane %v327, 0
    %v331 = vmul.f32 %v326, %v329
    %vm332 = vcmask 48128
    %v333 = vsel %vm332, %v331, 0.0
    %334 = vadd.xlane.f32.xlu0 %v333
    %v335 = vpop.xlane.xlu0 %334
    %v336 = vadd.f32 %v325, %v335
    %v337 = vld [vmem:[#allocation2] sm:$0x1]
    %v339 = vperm.slane %v337, 0
    %v341 = vadd.f32 %v336, %v339
    %vm342 = vcmask 7168
    %343 = vst.msk [vmem:[%s15] sm:$0xff] %vm342, %v341
    // Predicated region
    $region70: #{tpu_custom_call.1} parent=1 // pred_check
      _
    $region71: #{tpu_custom_call.1} parent=1 // pred_check_branch
      %345 = sbr.rel (0) target = $region73
    $region72: #{tpu_custom_call.1} parent=1 // pred_region
      _
    $region73: #{tpu_custom_call.1} parent=1 // pred_fallthru
      _
    // Predicated region
    $region74: #{tpu_custom_call.1} parent=1 // pred_check
      _
    $region75: #{tpu_custom_call.1} parent=1 // pred_check_branch
      %347 = sbr.rel (0) target = $region77
    $region76: #{tpu_custom_call.1} parent=1 // pred_region
      _
    $region77: #{tpu_custom_call.1} parent=1 // pred_fallthru
      _
    %348 = vsyncpa [#allocation4], 1
    %349 = vsyncpa [#allocation6], 1

</llo_original>
